<compile_context>
chip_gen: v7x
topology: tpu7x:2x2x1
jax: 0.10.0
libtpu: 0.0.40
codegen_flags: <defaults>
</compile_context>

<pallas_src>
import functools

import jax
import jax.numpy as jnp
from jax.experimental import pallas as pl
from jax.experimental.pallas import tpu as pltpu


def _round_up(x, m):
    return ((x + m - 1) // m) * m


def _wbce_kernel(x_ref, t_ref, pw_ref, out_ref, *, tile_rows, n_rows,
                 tiles_per_core):
    p = pl.program_id(0)   # core-split axis ("parallel")
    i = pl.program_id(1)   # row-tile reduction axis ("arbitrary")

    @pl.when(i == 0)
    def _init():
        out_ref[...] = jnp.zeros_like(out_ref)

    x = x_ref[...].astype(jnp.float32)    # (TM, C) predicted probabilities
    t = t_ref[...].astype(jnp.float32)    # (TM, C) targets
    pw = pw_ref[...].astype(jnp.float32)  # (1, C) positive-class weight

    # Mask rows outside [0, n_rows): last partial tile and fully out-of-range
    # tiles produced by the core split (their input block index is clamped).
    row0 = (p * tiles_per_core + i) * tile_rows
    row_ids = row0 + jax.lax.broadcasted_iota(jnp.int32, x.shape, 0)
    valid = row_ids < n_rows

    # Keep masked rows numerically safe before the logs (padded blocks may
    # contain garbage outside (0, 1)).
    x = jnp.where(valid, x, 0.5)
    t = jnp.where(valid, t, 0.0)

    # loss = -pos_weight * t * log(x) - (1 - t) * log(1 - x)
    loss = -pw * t * jnp.log(x) - (1.0 - t) * jnp.log(1.0 - x)
    loss = jnp.where(valid, loss, 0.0)

    # Per-class (sublane-axis) partial sums accumulated into the resident
    # output block; cross-lane reduce + mean divide happen in the wrapper.
    out_ref[...] += jnp.sum(loss, axis=0, keepdims=True)[None]


def weighted_bce_loss(sigmoid_x, targets, pos_weight, *, size_average=True,
                      reduce=True, tile_rows=None):
    """Pallas wrapper. sigmoid_x/targets: [N, C]; pos_weight: scalar/[C]/[1,C]."""
    if sigmoid_x.shape != targets.shape:
        raise ValueError(
            "Target size ({}) must be the same as input size ({})".format(
                targets.shape, sigmoid_x.shape))
    if sigmoid_x.ndim != 2:
        raise ValueError("expected [N, C] inputs")
    if not reduce:
        # TODO(synk): reduce=False (elementwise loss output) path not
        # implemented; the default module config uses reduce=True.
        raise NotImplementedError("reduce=False is not supported")

    n, c = sigmoid_x.shape
    pw = jnp.broadcast_to(
        jnp.asarray(pos_weight, dtype=jnp.float32).reshape(1, -1), (1, c))

    itemsize = jnp.dtype(sigmoid_x.dtype).itemsize
    if tile_rows is None:
        # Cap per-input pipeline buffer at ~2 MiB so 2 inputs x 2 buffers stay
        # well under the v7x scoped-VMEM default (64 MiB physical per TC).
        max_rows = max(8, (2 * 1024 * 1024) // max(1, c * itemsize))
        tile_rows = min(512, max_rows, _round_up(n, 8))
    tile_rows = max(8, (tile_rows // 8) * 8)

    num_row_blocks = pl.cdiv(n, tile_rows)
    # 2-way row split across TensorCores (v7x has 2 TCs; extra axis is a
    # cheap serial loop on v5e/v6e).
    ncores = 2 if num_row_blocks >= 2 else 1
    tiles_per_core = pl.cdiv(num_row_blocks, ncores)
    last_block = num_row_blocks - 1

    def row_map(p, i):
        return (jnp.minimum(p * tiles_per_core + i, last_block), 0)

    kernel = functools.partial(_wbce_kernel, tile_rows=tile_rows, n_rows=n,
                               tiles_per_core=tiles_per_core)

    vmem_bytes = (2 * 2 * tile_rows * c * itemsize   # x, t double buffers
                  + 2 * c * 4                        # pos_weight
                  + 2 * c * 4                        # resident output block
                  + (4 << 20))                       # headroom
    vmem_limit = int(min(max(vmem_bytes, 16 << 20), 32 << 20))

    cost = pl.CostEstimate(
        flops=7 * n * c,
        transcendentals=2 * n * c,
        bytes_accessed=2 * n * c * itemsize + c * 4 + ncores * c * 4)

    partials = pl.pallas_call(
        kernel,
        out_shape=jax.ShapeDtypeStruct((ncores, 1, c), jnp.float32),
        grid=(ncores, tiles_per_core),
        in_specs=[
            pl.BlockSpec((tile_rows, c), row_map),
            pl.BlockSpec((tile_rows, c), row_map),
            pl.BlockSpec((1, c), lambda p, i: (0, 0)),
        ],
        out_specs=pl.BlockSpec((1, 1, c), lambda p, i: (p, 0, 0)),
        compiler_params=pltpu.CompilerParams(
            dimension_semantics=("parallel", "arbitrary"),
            vmem_limit_bytes=vmem_limit),
        cost_estimate=cost,
    )(sigmoid_x, targets, pw)

    total = jnp.sum(partials)
    if size_average:
        total = total / jnp.float32(n * c)
    return total


class WeightedBCELoss:
    """Thin functional mirror of the PyTorch module (default config)."""

    def __init__(self, pos_weight=1.0, weight=None, pos_weight_is_dynamic=False,
                 size_average=True, reduce=True):
        # TODO(synk): per-class `weight` (0/1 class weighting) path not
        # implemented; the default module config uses weight=None.
        self.pos_weight = jnp.asarray(pos_weight, dtype=jnp.float32)
        self.weight = weight
        self.pos_weight_is_dynamic = pos_weight_is_dynamic
        self.size_average = size_average
        self.reduce = reduce

    def __call__(self, input, target):
        pw = self.pos_weight
        if self.pos_weight_is_dynamic:
            positive_counts = target.sum(axis=0)
            n_batch = target.shape[0]
            pw = (n_batch - positive_counts) / (positive_counts + 1e-5)
        return weighted_bce_loss(input, target, pw,
                                 size_average=self.size_average,
                                 reduce=self.reduce)


def _reference(sigmoid_x, targets, pos_weight, size_average=True):
    loss = (-pos_weight * targets * jnp.log(sigmoid_x)
            - (1.0 - targets) * jnp.log(1.0 - sigmoid_x))
    return jnp.mean(loss) if size_average else jnp.sum(loss)


if __name__ == "__main__":
    key = jax.random.PRNGKey(0)
    k1, k2, k3 = jax.random.split(key, 3)

    # Primary small case: N=8 samples, C=128 classes.
    N, C = 8, 128
    logits = jax.random.normal(k1, (N, C), dtype=jnp.float32)
    sigmoid_x = jax.nn.sigmoid(logits)
    targets = (jax.random.uniform(k2, (N, C)) > 0.5).astype(jnp.float32)
    pos_weight = 1.0 + jax.random.uniform(k3, (1, C), dtype=jnp.float32)

    module = WeightedBCELoss(pos_weight=pos_weight)
    out = jax.block_until_ready(module(sigmoid_x, targets))
    ref = _reference(sigmoid_x, targets, pos_weight, size_average=True)
    assert jnp.allclose(out, ref, rtol=1e-5, atol=1e-6), (out, ref)

    # Secondary case: exercises multi-tile pipelining, the 2-way core split,
    # partial-tile masking (N not a multiple of the tile) and non-128 C.
    k4, k5, k6 = jax.random.split(jax.random.PRNGKey(1), 3)
    N2, C2 = 300, 96
    sx2 = jax.nn.sigmoid(jax.random.normal(k4, (N2, C2), dtype=jnp.float32))
    t2 = (jax.random.uniform(k5, (N2, C2)) > 0.5).astype(jnp.float32)
    pw2 = 1.0 + jax.random.uniform(k6, (1, C2), dtype=jnp.float32)
    out2 = jax.block_until_ready(
        weighted_bce_loss(sx2, t2, pw2, size_average=True, tile_rows=64))
    ref2 = _reference(sx2, t2, pw2, size_average=True)
    assert jnp.allclose(out2, ref2, rtol=1e-4, atol=1e-5), (out2, ref2)

    print("KERNEL_OK")
</pallas_src>

<mosaic_0001>
module attributes {stable_mosaic.version = 11 : i64} {
  func.func @_wbce_kernel(%arg0: i32, %arg1: i32, %arg2: memref<8x128xf32, #tpu.memory_space<vmem>>, %arg3: memref<8x128xf32, #tpu.memory_space<vmem>>, %arg4: memref<1x128xf32, #tpu.memory_space<vmem>>, %arg5: memref<1x1x128xf32, #tpu.memory_space<vmem>>) attributes {dimension_semantics = [#tpu.dimension_semantics<parallel>, #tpu.dimension_semantics<arbitrary>], iteration_bounds = array<i64: 1, 1>, scalar_prefetch = 0 : i64, scratch_operands = 0 : i64, tpu.core_type = #tpu.core_type<tc>, window_params = [{transform_indices = @transform_0, window_bounds = array<i64: 8, 128>}, {transform_indices = @transform_1, window_bounds = array<i64: 8, 128>}, {pipeline_mode = #tpu.pipeline_mode<synchronous>, transform_indices = @transform_2, window_bounds = array<i64: 1, 128>}, {transform_indices = @transform_3, window_bounds = array<i64: 1, 1, 128>}]} {
    %c0_i32 = arith.constant 0 : i32
    %0 = arith.cmpi eq, %arg1, %c0_i32 : i32
    %1 = arith.extui %0 : i1 to i32
    %c0_i32_0 = arith.constant 0 : i32
    %2 = arith.cmpi ne, %1, %c0_i32_0 : i32
    scf.if %2 {
      %cst_19 = arith.constant 0.000000e+00 : f32
      %39 = vector.broadcast %cst_19 : f32 to vector<1x1x128xf32>
      %c0_20 = arith.constant 0 : index
      %c0_21 = arith.constant 0 : index
      %c0_22 = arith.constant 0 : index
      %40 = vector.load %arg5[%c0_20, %c0_21, %c0_22] : memref<1x1x128xf32, #tpu.memory_space<vmem>>, vector<1x1x128xf32>
      tpu.vector_store %arg5[%c0_20, %c0_21, %c0_22], %39 {strides = array<i32>} : memref<1x1x128xf32, #tpu.memory_space<vmem>>, vector<1x1x128xf32>,
    } else {
    }
    %c0 = arith.constant 0 : index
    %c0_1 = arith.constant 0 : index
    %3 = vector.load %arg2[%c0, %c0_1] : memref<8x128xf32, #tpu.memory_space<vmem>>, vector<8x128xf32>
    %c0_2 = arith.constant 0 : index
    %c0_3 = arith.constant 0 : index
    %4 = vector.load %arg3[%c0_2, %c0_3] : memref<8x128xf32, #tpu.memory_space<vmem>>, vector<8x128xf32>
    %c0_4 = arith.constant 0 : index
    %c0_5 = arith.constant 0 : index
    %5 = vector.load %arg4[%c0_4, %c0_5] : memref<1x128xf32, #tpu.memory_space<vmem>>, vector<1x128xf32>
    %c1_i32 = arith.constant 1 : i32
    %6 = arith.muli %arg0, %c1_i32 : i32
    %7 = arith.addi %6, %arg1 : i32
    %c8_i32 = arith.constant 8 : i32
    %8 = arith.muli %7, %c8_i32 : i32
    %9 = tpu.iota {dimensions = array<i32: 0>} : vector<8x128xi32>
    %10 = vector.broadcast %8 : i32 to vector<8x128xi32>
    %11 = arith.addi %10, %9 : vector<8x128xi32>
    %c8_i32_6 = arith.constant 8 : i32
    %12 = vector.broadcast %c8_i32_6 : i32 to vector<8x128xi32>
    %13 = arith.cmpi slt, %11, %12 : vector<8x128xi32>
    %cst = arith.constant 5.000000e-01 : f32
    %14 = vector.broadcast %cst : f32 to vector<8x128xf32>
    %15 = arith.select %13, %3, %14 : vector<8x128xi1>, vector<8x128xf32>
    %cst_7 = arith.constant 0.000000e+00 : f32
    %16 = vector.broadcast %cst_7 : f32 to vector<8x128xf32>
    %17 = arith.select %13, %4, %16 : vector<8x128xi1>, vector<8x128xf32>
    %cst_8 = arith.constant 0.000000e+00 : f32
    %18 = vector.broadcast %cst_8 : f32 to vector<1x128xf32>
    %19 = arith.subf %18, %5 : vector<1x128xf32>
    %20 = vector.broadcast %19 : vector<1x128xf32> to vector<8x128xf32>
    %21 = arith.mulf %20, %17 : vector<8x128xf32>
    %22 = math.log %15 : vector<8x128xf32>
    %23 = arith.mulf %21, %22 : vector<8x128xf32>
    %cst_9 = arith.constant 1.000000e+00 : f32
    %24 = vector.broadcast %cst_9 : f32 to vector<8x128xf32>
    %25 = arith.subf %24, %17 : vector<8x128xf32>
    %cst_10 = arith.constant 1.000000e+00 : f32
    %26 = vector.broadcast %cst_10 : f32 to vector<8x128xf32>
    %27 = arith.subf %26, %15 : vector<8x128xf32>
    %28 = math.log %27 : vector<8x128xf32>
    %29 = arith.mulf %25, %28 : vector<8x128xf32>
    %30 = arith.subf %23, %29 : vector<8x128xf32>
    %cst_11 = arith.constant 0.000000e+00 : f32
    %31 = vector.broadcast %cst_11 : f32 to vector<8x128xf32>
    %32 = arith.select %13, %30, %31 : vector<8x128xi1>, vector<8x128xf32>
    %c0_12 = arith.constant 0 : index
    %c0_13 = arith.constant 0 : index
    %c0_14 = arith.constant 0 : index
    %33 = vector.load %arg5[%c0_12, %c0_13, %c0_14] : memref<1x1x128xf32, #tpu.memory_space<vmem>>, vector<1x1x128xf32>
    %cst_15 = arith.constant dense<0.000000e+00> : vector<128xf32>
    %34 = vector.multi_reduction <add>, %32, %cst_15 [0] : vector<8x128xf32> to vector<128xf32>
    %35 = vector.shape_cast %34 : vector<128xf32> to vector<1x128xf32>
    %36 = vector.shape_cast %35 : vector<1x128xf32> to vector<1x1x128xf32>
    %37 = arith.addf %33, %36 : vector<1x1x128xf32>
    %c0_16 = arith.constant 0 : index
    %c0_17 = arith.constant 0 : index
    %c0_18 = arith.constant 0 : index
    %38 = vector.load %arg5[%c0_16, %c0_17, %c0_18] : memref<1x1x128xf32, #tpu.memory_space<vmem>>, vector<1x1x128xf32>
    tpu.vector_store %arg5[%c0_16, %c0_17, %c0_18], %37 {strides = array<i32>} : memref<1x1x128xf32, #tpu.memory_space<vmem>>, vector<1x1x128xf32>,
    return
  }
  func.func @transform_0(%arg0: i32, %arg1: i32) -> (i32, i32) {
    %c1_i32 = arith.constant 1 : i32
    %0 = arith.muli %arg0, %c1_i32 : i32
    %1 = arith.addi %0, %arg1 : i32
    %c0_i32 = arith.constant 0 : i32
    %2 = arith.minsi %1, %c0_i32 : i32
    %c0_i32_0 = arith.constant 0 : i32
    %c0_i32_1 = arith.constant 0 : i32
    return %2, %c0_i32_0 : i32, i32
  }
  func.func @transform_1(%arg0: i32, %arg1: i32) -> (i32, i32) {
    %c1_i32 = arith.constant 1 : i32
    %0 = arith.muli %arg0, %c1_i32 : i32
    %1 = arith.addi %0, %arg1 : i32
    %c0_i32 = arith.constant 0 : i32
    %2 = arith.minsi %1, %c0_i32 : i32
    %c0_i32_0 = arith.constant 0 : i32
    %c0_i32_1 = arith.constant 0 : i32
    return %2, %c0_i32_0 : i32, i32
  }
  func.func @transform_2(%arg0: i32, %arg1: i32) -> (i32, i32) {
    %c0_i32 = arith.constant 0 : i32
    %c0_i32_0 = arith.constant 0 : i32
    %c0_i32_1 = arith.constant 0 : i32
    return %c0_i32, %c0_i32_0 : i32, i32
  }
  func.func @transform_3(%arg0: i32, %arg1: i32) -> (i32, i32, i32) {
    %c0_i32 = arith.constant 0 : i32
    %c0_i32_0 = arith.constant 0 : i32
    %c0_i32_1 = arith.constant 0 : i32
    return %arg0, %c0_i32, %c0_i32_0 : i32, i32, i32
  }
}

</mosaic_0001>

<llo_original>
// kernel: tpu_custom_call.1
$region0: #{tpu_custom_call.1}
  #allocation0 [shape = 'u32[]', space=smem, size = 0x4, offset = 0x4, fixed_abs, tag = 'smem constant byte address 0x4 - core index']
  #allocation1 [shape = 'u32[144,128]{1,0:T(1,128)}', space=vmem, size = 0x12000, scoped, tag = 'internal scratch']
  %s0 = inlined_call_operand.hbm [shape: f32[8,128], index: 0, kind: input, shape index: {}]
  %s1 = inlined_call_operand.hbm [shape: f32[8,128], index: 1, kind: input, shape index: {}]
  %s2 = inlined_call_operand.vmem [shape: f32[1,128], index: 2, kind: input, shape index: {}]
  %s3 = inlined_call_operand.hbm [shape: f32[1,1,128], index: 3, kind: output, shape index: {}]
  %s4 = sld [smem:[#allocation0]]
  $region34: #{tpu_custom_call.1} parent=0
    _
  %s6 = ssub.s32 1, %s4
  %s7 = scalar_select 0, %s6, %s4
  $region1: #{tpu_custom_call.1} parent=0
    #allocation2 [shape = 'u8[4096]{0}', space=vmem, size = 0x1000, scoped, tag = 'input window, operand 0, single buffered']
    #allocation3 [shape = 's32[1]{0}', space=sflag, size = 0x4, scoped, tag = 'scoped memory for tpu_custom_call.1']
    #allocation4 [shape = 's32[1]{0}', space=sflag, size = 0x4, scoped, tag = 'scoped memory for tpu_custom_call.1']
    #allocation5 [shape = 'u8[4096]{0}', space=vmem, size = 0x1000, scoped, tag = 'input window, operand 1, single buffered']
    #allocation6 [shape = 's32[1]{0}', space=sflag, size = 0x4, scoped, tag = 'scoped memory for tpu_custom_call.1']
    #allocation7 [shape = 'u8[512]{0}', space=vmem, size = 0x400, scoped, tag = 'output window, operand 0, single buffered']
    %8 = vsyncpa [#allocation3], 0
    %9 = vsyncpa [#allocation6], 0
    %10 = vsyncpa [#allocation4], 0
    // Predicated region
    $region2: #{tpu_custom_call.1} parent=1 // pred_check
      _
    $region3: #{tpu_custom_call.1} parent=1 // pred_check_branch
      %12 = sbr.rel (0) target = $region5
    $region4: #{tpu_custom_call.1} parent=1 // pred_region
      %s13 = sadd.s32 0, 0
      %p14 = scmp.lt.s32.totalorder %s13, 0
      %s15 = scalar_select %p14, %s13, 0
      %s17 = ssub.s32 128, 128
      %18 = vsyncadd [#allocation3], %s17
      %s19 = smul.addr %s15, 128
      %s20 = scalar_lea.hbm %s0, %s19
      %s22 = sshll.u32 [#allocation2], 4
      %s23 = int_to_ptr.vmem [resolvable:$true] %s22
      %25 = dma.hbm_to_vmem [thread:$0]  %s20, 128, %s23, [#allocation3]
    $region5: #{tpu_custom_call.1} parent=1 // pred_fallthru
      _
    // Predicated region
    $region6: #{tpu_custom_call.1} parent=1 // pred_check
      _
    $region7: #{tpu_custom_call.1} parent=1 // pred_check_branch
      %27 = sbr.rel (0) target = $region9
    $region8: #{tpu_custom_call.1} parent=1 // pred_region
      %s28 = sadd.s32 0, 0
      %p29 = scmp.lt.s32.totalorder %s28, 0
      %s30 = scalar_select %p29, %s28, 0
      %s32 = ssub.s32 128, 128
      %33 = vsyncadd [#allocation6], %s32
      %s34 = smul.addr %s30, 128
      %s35 = scalar_lea.hbm %s1, %s34
      %s37 = sshll.u32 [#allocation5], 4
      %s38 = int_to_ptr.vmem [resolvable:$true] %s37
      %40 = dma.hbm_to_vmem [thread:$0]  %s35, 128, %s38, [#allocation6]
    $region9: #{tpu_custom_call.1} parent=1 // pred_fallthru
      _
    // Predicated region
    $region10: #{tpu_custom_call.1} parent=1 // pred_check
      _
    $region11: #{tpu_custom_call.1} parent=1 // pred_check_branch
      %42 = sbr.rel (0) target = $region13
    $region12: #{tpu_custom_call.1} parent=1 // pred_region
      _
    $region13: #{tpu_custom_call.1} parent=1 // pred_fallthru
      _
    // Predicated region
    $region14: #{tpu_custom_call.1} parent=1 // pred_check
      _
    $region15: #{tpu_custom_call.1} parent=1 // pred_check_branch
      %44 = sbr.rel (0) target = $region17
    $region16: #{tpu_custom_call.1} parent=1 // pred_region
      %45 = dma.done [#allocation3], 128
    $region17: #{tpu_custom_call.1} parent=1 // pred_fallthru
      _
    // Predicated region
    $region18: #{tpu_custom_call.1} parent=1 // pred_check
      _
    $region19: #{tpu_custom_call.1} parent=1 // pred_check_branch
      %47 = sbr.rel (0) target = $region21
    $region20: #{tpu_custom_call.1} parent=1 // pred_region
      %48 = dma.done [#allocation6], 128
    $region21: #{tpu_custom_call.1} parent=1 // pred_fallthru
      _
    %s49 = sadd.s32 0, 0
    %p50 = scmp.lt.s32.totalorder %s49, 0
    %s51 = scalar_select %p50, %s49, 0
    %s52 = sadd.s32 0, 0
    %p53 = scmp.lt.s32.totalorder %s52, 0
    %s54 = scalar_select %p53, %s52, 0
    %p55 = scmp.eq.s32.totalorder 0, 0
    // Predicated region
    $region22: #{tpu_custom_call.1} parent=1 // pred_check
      %p56 = pneg %p55
    $region23: #{tpu_custom_call.1} parent=1 // pred_check_branch
      %58 = sbr.rel (%p56) target = $region25
    $region24: #{tpu_custom_call.1} parent=1 // pred_region
      %59 = vst [vmem:[#allocation7] sm:$0x1] 0.0
    $region25: #{tpu_custom_call.1} parent=1 // pred_fallthru
      _
    %v60 = vld [vmem:[#allocation2] sm:$0xff]
    %v61 = vld [vmem:[#allocation5] sm:$0xff]
    %v62 = vld [vmem:[%s2] sm:$0x1]
    %s63 = sadd.s32 0, 0
    %s64 = smul.u32 %s63, 8
    %v65 = vlaneseq
    %v66 = vshrl.u32 %v65, 7
    %v67 = vstv %s64
    %v68 = vadd.s32 %v67, %v66
    %vm69 = vcmp.lt.s32.totalorder %v68, 8
    %v70 = vsel %vm69, %v60, 0.5
    %v71 = vsel %vm69, %v61, 0.0
    %v72 = vsub.f32 0.0, %v62
    %v74 = vlaneseq
    %v75 = vshrl.u32 %v74, 7
    %v76 = vsub.s32 0, %v75
    %v77 = vrot.slane %v72, %v76
    %v79 = vmul.f32 %v77, %v71
    %v80 = vlog2.pop %v70
    %v81 = vmul.f32 %v80, 0.6931472
    %v82 = vmul.f32 %v79, %v81
    %v83 = vsub.f32 1.0, %v71
    %v84 = vsub.f32 1.0, %v70
    %v85 = vlog2.pop %v84
    %v86 = vmul.f32 %v85, 0.6931472
    %v87 = vmul.f32 %v83, %v86
    %v88 = vsub.f32 %v82, %v87
    %v89 = vsel %vm69, %v88, 0.0
    %v90 = vld [vmem:[#allocation7] sm:$0x1]
    %v91 = vrot.slane %v89, 4
    %v92 = vadd.f32 %v89, %v91
    %v93 = vrot.slane %v92, 2
    %v94 = vadd.f32 %v92, %v93
    %v95 = vrot.slane %v94, 1
    %v96 = vadd.f32 %v94, %v95
    %v97 = vadd.f32 %v90, %v96
    %98 = vst [vmem:[#allocation7] sm:$0x1] %v97
    // Predicated region
    $region26: #{tpu_custom_call.1} parent=1 // pred_check
      _
    $region27: #{tpu_custom_call.1} parent=1 // pred_check_branch
      %100 = sbr.rel (0) target = $region29
    $region28: #{tpu_custom_call.1} parent=1 // pred_region
      %s102 = ssub.s32 16, 16
      %103 = vsyncadd [#allocation4], %s102
      %s105 = sshll.u32 [#allocation7], 4
      %s106 = int_to_ptr.vmem [resolvable:$true] %s105
      %108 = dma.vmem_to_hbm [thread:$0]  %s106, 16, %s3, [#allocation4]
    $region29: #{tpu_custom_call.1} parent=1 // pred_fallthru
      _
    // Predicated region
    $region30: #{tpu_custom_call.1} parent=1 // pred_check
      _
    $region31: #{tpu_custom_call.1} parent=1 // pred_check_branch
      %110 = sbr.rel (0) target = $region33
    $region32: #{tpu_custom_call.1} parent=1 // pred_region
      %111 = dma.done [#allocation4], 16
    $region33: #{tpu_custom_call.1} parent=1 // pred_fallthru
      _
    %112 = vsyncpa [#allocation3], 1
    %113 = vsyncpa [#allocation6], 1
    %114 = vsyncpa [#allocation4], 1

</llo_original>
